<compile_context>
chip_gen: v5e
topology: v5e:2x2
jax: 0.10.0
libtpu: 0.0.40
codegen_flags: <defaults>
</compile_context>

<pallas_src>
import functools

import jax
import jax.numpy as jnp
from jax import lax
from jax.experimental import pallas as pl
from jax.experimental.pallas import tpu as pltpu

_ALPHA = 0.25      # assumed BinaryFocalLoss alpha
_GAMMA = 2         # assumed BinaryFocalLoss gamma (kept an integer power)
_SMOOTH = 0.0      # smp DiceLoss default smooth
_EPS = 1e-7        # smp DiceLoss eps / MaskIoULoss eps

_LANES = 128       # TPU lane width
_TR_MAX = 8192     # rows per chunk: 8192*128 f32 = 4 MiB per input block,
                   # 2 inputs x 2 pipeline buffers = 16 MiB total
_TARGET_ELEMS = _TR_MAX * _LANES          # batch-fold target for small masks
_VMEM_LIMIT = 32 * 1024 * 1024            # explicit scoped-VMEM limit


def _criterion_sums_kernel(pred_ref, true_ref, out_ref, *, rows_in_last):
    """Fused per-chunk focal/sigmoid partial sums.

    pred_ref/true_ref: (bb, tr, C) chunk of the 3-D mask view (native dtype).
    out_ref:           (bb, 4, C) per-batch, per-lane partial sums
                       [focal, intersection, sum(sigmoid), sum(gt)];
                       resident across the last ("arbitrary") grid axis.
    rows_in_last:      None if every chunk is fully in-bounds, otherwise the
                       static number of valid rows in the LAST chunk.
    """
    c = pl.program_id(1)
    last = pl.num_programs(1) - 1

    @pl.when(c == 0)
    def _():
        out_ref[...] = jnp.zeros_like(out_ref)

    def accumulate(valid_rows):
        x = pred_ref[...].astype(jnp.float32)            # logits (bb, tr, C)
        t = true_ref[...]
        if t.dtype == jnp.bool_:
            g_bool = t
        else:
            g_bool = t.astype(jnp.float32) != 0.0        # binary mask -> bool

        if valid_rows is not None:                       # ragged last chunk
            valid = lax.broadcasted_iota(jnp.int32, x.shape, 1) < valid_rows
            x = jnp.where(valid, x, 0.0)                 # sanitize OOB garbage
            g_bool = jnp.logical_and(g_bool, valid)
            validf = valid.astype(jnp.float32)

        g = g_bool.astype(jnp.float32)

        # sigmoid + stable BCE-with-logits sharing a single exp(-|x|);
        # exact reciprocal (no approx bias), EUP has plenty of slack here.
        e = jnp.exp(-jnp.abs(x))
        r = 1.0 / (1.0 + e)
        p = jnp.where(x >= 0.0, r, e * r)                # sigmoid(x)
        bce = jnp.maximum(x, 0.0) - jnp.where(g_bool, x, 0.0) + jnp.log1p(e)

        # Select-based focal terms (binary GT); gamma == 2 stays an int power.
        one_m = jnp.where(g_bool, 1.0 - p, p)            # = 1 - p_t
        alpha_t = jnp.where(g_bool, _ALPHA, 1.0 - _ALPHA)
        focal = alpha_t * (one_m * one_m) * bce

        p_src = p
        if valid_rows is not None:                       # zero tail contributions
            focal = focal * validf
            p_src = p * validf

        # Single merged update: sublane-only reductions, stacked once into the
        # resident lane-dense (bb, 4, C) output block.
        out_ref[...] += jnp.concatenate(
            [jnp.sum(focal, axis=1, keepdims=True),
             jnp.sum(p * g, axis=1, keepdims=True),
             jnp.sum(p_src, axis=1, keepdims=True),
             jnp.sum(g, axis=1, keepdims=True)], axis=1)

    if rows_in_last is None:
        accumulate(None)
    else:
        # Dual path: fully in-bounds chunks pay zero masking cost.
        @pl.when(c != last)
        def _():
            accumulate(None)

        @pl.when(c == last)
        def _():
            accumulate(rows_in_last)


def _per_batch_sums(pred_masks, true, *, tr_max=_TR_MAX):
    """Returns (B, 4) f32: [focal_sum, intersection, sum(sigmoid), sum(gt)]."""
    assert tr_max % 8 == 0
    B, H, W = pred_masks.shape
    N = H * W

    # Copy-free 3-D view: lane-dense when possible, else tile [B, H, W] directly.
    if N % _LANES == 0:
        rows, cols = N // _LANES, _LANES
        pred3 = pred_masks.reshape(B, rows, cols)
        true3 = true.reshape(B, rows, cols)
    else:
        rows, cols = H, W
        pred3, true3 = pred_masks, true

    # Row chunking: multiple of 8 sublanes, capped at tr_max rows per chunk.
    tr = min(tr_max, ((rows + 7) // 8) * 8)
    n_chunks = -(-rows // tr)
    rows_in_last = rows - (n_chunks - 1) * tr
    ragged = rows_in_last != tr                # last chunk needs in-kernel mask

    # Batch folding for small masks: several batch elements per block so the
    # per-grid-step overhead is amortized (target ~1M elements per block).
    bb = 1
    if n_chunks == 1:
        max_bb = min(B, max(1, _TARGET_ELEMS // (tr * cols)))
        for d in range(max_bb, 0, -1):
            if B % d == 0:
                bb = d
                break
    grid = (B // bb, n_chunks)                 # reduction (chunk) axis last

    kernel = functools.partial(
        _criterion_sums_kernel,
        rows_in_last=rows_in_last if ragged else None)

    in_spec = pl.BlockSpec((bb, tr, cols), lambda b, c: (b, c, 0))
    out_spec = pl.BlockSpec((bb, 4, cols), lambda b, c: (b, 0, 0))

    total = B * rows * cols
    in_bytes = (pred3.size * pred3.dtype.itemsize
                + true3.size * true3.dtype.itemsize)
    cost = pl.CostEstimate(flops=25 * total, transcendentals=2 * total,
                           bytes_accessed=in_bytes + B * 4 * cols * 4)

    out = pl.pallas_call(
        kernel,
        out_shape=jax.ShapeDtypeStruct((B, 4, cols), jnp.float32),
        grid_spec=pltpu.PrefetchScalarGridSpec(
            num_scalar_prefetch=0,
            grid=grid,
            in_specs=[in_spec, in_spec],
            out_specs=out_spec),
        compiler_params=pltpu.CompilerParams(
            dimension_semantics=("parallel", "arbitrary"),
            vmem_limit_bytes=_VMEM_LIMIT),
        cost_estimate=cost,
    )(pred3, true3)

    # Tiny epilogue: one cross-lane sum per batch element, in plain JAX.
    return jnp.sum(out, axis=-1)               # (B, 4)


def criterion_forward(outputs, true, loss_weight, *, tr_max=None):
    """JAX/Pallas equivalent of Criterion.forward.

    outputs: {'pred_masks': [B,H,W] logits, 'pred_ious': [B]}
    true:    [B,H,W] binary mask (any dtype: f32 / bf16 / int8 / bool)
    """
    pred_masks = outputs['pred_masks']
    pred_ious = outputs['pred_ious'].astype(jnp.float32)
    B, H, W = pred_masks.shape

    sums = _per_batch_sums(pred_masks, true,
                           tr_max=_TR_MAX if tr_max is None else tr_max)
    focal_s, inter, psum, gsum = sums[:, 0], sums[:, 1], sums[:, 2], sums[:, 3]

    # --- focal loss (mean over all pixels) ---
    loss_focal = jnp.sum(focal_s) / jnp.float32(B * H * W)

    # --- dice loss (binary mode: reduce over batch + spatial dims) ---
    inter_all = jnp.sum(inter)
    card_all = jnp.sum(psum) + jnp.sum(gsum)
    dice_score = (2.0 * inter_all + _SMOOTH) / jnp.maximum(card_all + _SMOOTH, _EPS)
    loss_dice = (1.0 - dice_score) * (jnp.sum(gsum) > 0).astype(jnp.float32)

    # --- mask IoU loss ---
    union = psum + gsum - inter
    iou = (inter + _EPS) / (union + _EPS)
    loss_iou = jnp.mean((iou - pred_ious) ** 2)

    return {
        'loss_focal': loss_focal * loss_weight['loss_focal'],
        'loss_dice': loss_dice * loss_weight['loss_dice'],
        'loss_iou': loss_iou * loss_weight['loss_iou'],
    }


def _criterion_reference(outputs, true, loss_weight):
    """Pure-JAX reference (same assumed focal/dice definitions)."""
    x = outputs['pred_masks'].astype(jnp.float32)
    g = true.astype(jnp.float32)
    pred_ious = outputs['pred_ious'].astype(jnp.float32)

    p = jax.nn.sigmoid(x)
    bce = jnp.maximum(x, 0.0) - x * g + jnp.log1p(jnp.exp(-jnp.abs(x)))
    p_t = p * g + (1.0 - p) * (1.0 - g)
    alpha_t = _ALPHA * g + (1.0 - _ALPHA) * (1.0 - g)
    focal = alpha_t * (1.0 - p_t) ** _GAMMA * bce
    loss_focal = jnp.mean(focal)

    inter = jnp.sum(p * g, axis=(1, 2))
    psum = jnp.sum(p, axis=(1, 2))
    gsum = jnp.sum(g, axis=(1, 2))
    dice_score = (2.0 * jnp.sum(inter) + _SMOOTH) / jnp.maximum(
        jnp.sum(psum) + jnp.sum(gsum) + _SMOOTH, _EPS)
    loss_dice = (1.0 - dice_score) * (jnp.sum(gsum) > 0).astype(jnp.float32)

    union = psum + gsum - inter
    iou = (inter + _EPS) / (union + _EPS)
    loss_iou = jnp.mean((iou - pred_ious) ** 2)

    return {
        'loss_focal': loss_focal * loss_weight['loss_focal'],
        'loss_dice': loss_dice * loss_weight['loss_dice'],
        'loss_iou': loss_iou * loss_weight['loss_iou'],
    }


if __name__ == "__main__":
    loss_weight = {'loss_focal': 20.0, 'loss_dice': 1.0, 'loss_iou': 1.0}

    def make_inputs(seed, B, H, W, pred_dtype, true_dtype):
        k1, k2, k3 = jax.random.split(jax.random.PRNGKey(seed), 3)
        pred_masks = jax.random.normal(k1, (B, H, W)).astype(pred_dtype)
        true = (jax.random.uniform(k2, (B, H, W)) > 0.5).astype(true_dtype)
        pred_ious = jax.random.uniform(k3, (B,), dtype=jnp.float32)
        return {'pred_masks': pred_masks, 'pred_ious': pred_ious}, true

    # Cases exercise: batch folding + ragged lane-dense tail, ragged
    # [B,H,W]-layout tail, multi-chunk accumulation with native bf16/int8.
    cases = [
        # (name,                B,  H,   W,  pred dtype,   gt dtype,    tr_max)
        ("aligned_small_fold",  2,  16,  16, jnp.float32,  jnp.float32, None),
        ("ragged_W_layout",     3,  20,  33, jnp.float32,  jnp.float32, None),
        ("multi_chunk_bf16_i8", 2, 128,  64, jnp.bfloat16, jnp.int8,    32),
    ]

    for i, (name, B, H, W, pdt, tdt, tr_max) in enumerate(cases):
        outputs, true = make_inputs(i, B, H, W, pdt, tdt)
        got = criterion_forward(outputs, true, loss_weight, tr_max=tr_max)
        got = {k: jax.block_until_ready(v) for k, v in got.items()}
        ref = _criterion_reference(outputs, true, loss_weight)
        for k in got:
            if not jnp.allclose(got[k], ref[k], rtol=1e-3, atol=1e-5):
                raise AssertionError(
                    f"{name}/{k}: pallas={float(got[k]):.6f} "
                    f"ref={float(ref[k]):.6f}")

    print("KERNEL_OK")
</pallas_src>

<mosaic_0001>
module attributes {stable_mosaic.version = 11 : i64} {
  func.func @_criterion_sums_kernel(%arg0: i32, %arg1: i32, %arg2: memref<2x8x128xf32, #tpu.memory_space<vmem>>, %arg3: memref<2x8x128xf32, #tpu.memory_space<vmem>>, %arg4: memref<2x4x128xf32, #tpu.memory_space<vmem>>) attributes {dimension_semantics = [#tpu.dimension_semantics<parallel>, #tpu.dimension_semantics<arbitrary>], iteration_bounds = array<i64: 1, 1>, scalar_prefetch = 0 : i64, scratch_operands = 0 : i64, tpu.core_type = #tpu.core_type<tc>, window_params = [{transform_indices = @transform_0, window_bounds = array<i64: 2, 8, 128>}, {transform_indices = @transform_1, window_bounds = array<i64: 2, 8, 128>}, {transform_indices = @transform_2, window_bounds = array<i64: 2, 4, 128>}]} {
    %c0_i32 = arith.constant 0 : i32
    %0 = arith.cmpi eq, %arg1, %c0_i32 : i32
    %1 = arith.extui %0 : i1 to i32
    %c0_i32_0 = arith.constant 0 : i32
    %2 = arith.cmpi ne, %1, %c0_i32_0 : i32
    scf.if %2 {
      %cst = arith.constant 0.000000e+00 : f32
      %9 = vector.broadcast %cst : f32 to vector<2x4x128xf32>
      %c0 = arith.constant 0 : index
      %c0_5 = arith.constant 0 : index
      %c0_6 = arith.constant 0 : index
      %10 = vector.load %arg4[%c0, %c0_5, %c0_6] : memref<2x4x128xf32, #tpu.memory_space<vmem>>, vector<2x4x128xf32>
      tpu.vector_store %arg4[%c0, %c0_5, %c0_6], %9 {strides = array<i32>} : memref<2x4x128xf32, #tpu.memory_space<vmem>>, vector<2x4x128xf32>,
    } else {
    }
    %c0_i32_1 = arith.constant 0 : i32
    %3 = arith.cmpi ne, %arg1, %c0_i32_1 : i32
    %4 = arith.extui %3 : i1 to i32
    %c0_i32_2 = arith.constant 0 : i32
    %5 = arith.cmpi ne, %4, %c0_i32_2 : i32
    scf.if %5 {
      %c0 = arith.constant 0 : index
      %c0_5 = arith.constant 0 : index
      %c0_6 = arith.constant 0 : index
      %9 = vector.load %arg2[%c0, %c0_5, %c0_6] : memref<2x8x128xf32, #tpu.memory_space<vmem>>, vector<2x8x128xf32>
      %c0_7 = arith.constant 0 : index
      %c0_8 = arith.constant 0 : index
      %c0_9 = arith.constant 0 : index
      %10 = vector.load %arg3[%c0_7, %c0_8, %c0_9] : memref<2x8x128xf32, #tpu.memory_space<vmem>>, vector<2x8x128xf32>
      %cst = arith.constant 0.000000e+00 : f32
      %11 = vector.broadcast %cst : f32 to vector<2x8x128xf32>
      %12 = arith.cmpf one, %10, %11 : vector<2x8x128xf32>
      %13 = arith.extui %12 : vector<2x8x128xi1> to vector<2x8x128xi32>
      %14 = arith.sitofp %13 : vector<2x8x128xi32> to vector<2x8x128xf32>
      %15 = math.absf %9 : vector<2x8x128xf32>
      %cst_10 = arith.constant 0.000000e+00 : f32
      %16 = vector.broadcast %cst_10 : f32 to vector<2x8x128xf32>
      %17 = arith.subf %16, %15 : vector<2x8x128xf32>
      %18 = math.exp %17 : vector<2x8x128xf32>
      %cst_11 = arith.constant 1.000000e+00 : f32
      %19 = vector.broadcast %cst_11 : f32 to vector<2x8x128xf32>
      %20 = arith.addf %19, %18 : vector<2x8x128xf32>
      %cst_12 = arith.constant 1.000000e+00 : f32
      %21 = vector.broadcast %cst_12 : f32 to vector<2x8x128xf32>
      %22 = arith.divf %21, %20 : vector<2x8x128xf32>
      %cst_13 = arith.constant 0.000000e+00 : f32
      %23 = vector.broadcast %cst_13 : f32 to vector<2x8x128xf32>
      %24 = arith.cmpf oge, %9, %23 : vector<2x8x128xf32>
      %25 = arith.mulf %18, %22 : vector<2x8x128xf32>
      %26 = arith.select %24, %22, %25 : vector<2x8x128xi1>, vector<2x8x128xf32>
      %cst_14 = arith.constant 0.000000e+00 : f32
      %27 = vector.broadcast %cst_14 : f32 to vector<2x8x128xf32>
      %28 = arith.maximumf %9, %27 : vector<2x8x128xf32>
      %cst_15 = arith.constant 0.000000e+00 : f32
      %29 = vector.broadcast %cst_15 : f32 to vector<2x8x128xf32>
      %30 = arith.select %12, %9, %29 : vector<2x8x128xi1>, vector<2x8x128xf32>
      %31 = arith.subf %28, %30 : vector<2x8x128xf32>
      %32 = math.log1p %18 : vector<2x8x128xf32>
      %33 = arith.addf %31, %32 : vector<2x8x128xf32>
      %cst_16 = arith.constant 1.000000e+00 : f32
      %34 = vector.broadcast %cst_16 : f32 to vector<2x8x128xf32>
      %35 = arith.subf %34, %26 : vector<2x8x128xf32>
      %36 = arith.select %12, %35, %26 : vector<2x8x128xi1>, vector<2x8x128xf32>
      %cst_17 = arith.constant 2.500000e-01 : f32
      %cst_18 = arith.constant 7.500000e-01 : f32
      %37 = vector.broadcast %cst_17 : f32 to vector<2x8x128xf32>
      %38 = vector.broadcast %cst_18 : f32 to vector<2x8x128xf32>
      %39 = arith.select %12, %37, %38 : vector<2x8x128xi1>, vector<2x8x128xf32>
      %40 = arith.mulf %36, %36 : vector<2x8x128xf32>
      %41 = arith.mulf %39, %40 : vector<2x8x128xf32>
      %42 = arith.mulf %41, %33 : vector<2x8x128xf32>
      %c0_19 = arith.constant 0 : index
      %c0_20 = arith.constant 0 : index
      %c0_21 = arith.constant 0 : index
      %43 = vector.load %arg4[%c0_19, %c0_20, %c0_21] : memref<2x4x128xf32, #tpu.memory_space<vmem>>, vector<2x4x128xf32>
      %cst_22 = arith.constant dense<0.000000e+00> : vector<2x128xf32>
      %44 = vector.multi_reduction <add>, %42, %cst_22 [1] : vector<2x8x128xf32> to vector<2x128xf32>
      %45 = vector.shape_cast %44 : vector<2x128xf32> to vector<2x1x128xf32>
      %46 = arith.mulf %26, %14 : vector<2x8x128xf32>
      %cst_23 = arith.constant dense<0.000000e+00> : vector<2x128xf32>
      %47 = vector.multi_reduction <add>, %46, %cst_23 [1] : vector<2x8x128xf32> to vector<2x128xf32>
      %48 = vector.shape_cast %47 : vector<2x128xf32> to vector<2x1x128xf32>
      %cst_24 = arith.constant dense<0.000000e+00> : vector<2x128xf32>
      %49 = vector.multi_reduction <add>, %26, %cst_24 [1] : vector<2x8x128xf32> to vector<2x128xf32>
      %50 = vector.shape_cast %49 : vector<2x128xf32> to vector<2x1x128xf32>
      %cst_25 = arith.constant dense<0.000000e+00> : vector<2x128xf32>
      %51 = vector.multi_reduction <add>, %14, %cst_25 [1] : vector<2x8x128xf32> to vector<2x128xf32>
      %52 = vector.shape_cast %51 : vector<2x128xf32> to vector<2x1x128xf32>
      %53 = tpu.concatenate %45, %48, %50, %52 in 1 : vector<2x1x128xf32>, vector<2x1x128xf32>, vector<2x1x128xf32>, vector<2x1x128xf32> -> vector<2x4x128xf32>
      %54 = arith.addf %43, %53 : vector<2x4x128xf32>
      %c0_26 = arith.constant 0 : index
      %c0_27 = arith.constant 0 : index
      %c0_28 = arith.constant 0 : index
      %55 = vector.load %arg4[%c0_26, %c0_27, %c0_28] : memref<2x4x128xf32, #tpu.memory_space<vmem>>, vector<2x4x128xf32>
      tpu.vector_store %arg4[%c0_26, %c0_27, %c0_28], %54 {strides = array<i32>} : memref<2x4x128xf32, #tpu.memory_space<vmem>>, vector<2x4x128xf32>,
    } else {
    }
    %c0_i32_3 = arith.constant 0 : i32
    %6 = arith.cmpi eq, %arg1, %c0_i32_3 : i32
    %7 = arith.extui %6 : i1 to i32
    %c0_i32_4 = arith.constant 0 : i32
    %8 = arith.cmpi ne, %7, %c0_i32_4 : i32
    scf.if %8 {
      %c0 = arith.constant 0 : index
      %c0_5 = arith.constant 0 : index
      %c0_6 = arith.constant 0 : index
      %9 = vector.load %arg2[%c0, %c0_5, %c0_6] : memref<2x8x128xf32, #tpu.memory_space<vmem>>, vector<2x8x128xf32>
      %c0_7 = arith.constant 0 : index
      %c0_8 = arith.constant 0 : index
      %c0_9 = arith.constant 0 : index
      %10 = vector.load %arg3[%c0_7, %c0_8, %c0_9] : memref<2x8x128xf32, #tpu.memory_space<vmem>>, vector<2x8x128xf32>
      %cst = arith.constant 0.000000e+00 : f32
      %11 = vector.broadcast %cst : f32 to vector<2x8x128xf32>
      %12 = arith.cmpf one, %10, %11 : vector<2x8x128xf32>
      %13 = tpu.iota {dimensions = array<i32: 1>} : vector<2x8x128xi32>
      %c2_i32 = arith.constant 2 : i32
      %14 = vector.broadcast %c2_i32 : i32 to vector<2x8x128xi32>
      %15 = arith.cmpi slt, %13, %14 : vector<2x8x128xi32>
      %cst_10 = arith.constant 0.000000e+00 : f32
      %16 = vector.broadcast %cst_10 : f32 to vector<2x8x128xf32>
      %17 = arith.select %15, %9, %16 : vector<2x8x128xi1>, vector<2x8x128xf32>
      %18 = arith.andi %12, %15 : vector<2x8x128xi1>
      %19 = arith.extui %15 : vector<2x8x128xi1> to vector<2x8x128xi32>
      %20 = arith.sitofp %19 : vector<2x8x128xi32> to vector<2x8x128xf32>
      %21 = arith.extui %18 : vector<2x8x128xi1> to vector<2x8x128xi32>
      %22 = arith.sitofp %21 : vector<2x8x128xi32> to vector<2x8x128xf32>
      %23 = math.absf %17 : vector<2x8x128xf32>
      %cst_11 = arith.constant 0.000000e+00 : f32
      %24 = vector.broadcast %cst_11 : f32 to vector<2x8x128xf32>
      %25 = arith.subf %24, %23 : vector<2x8x128xf32>
      %26 = math.exp %25 : vector<2x8x128xf32>
      %cst_12 = arith.constant 1.000000e+00 : f32
      %27 = vector.broadcast %cst_12 : f32 to vector<2x8x128xf32>
      %28 = arith.addf %27, %26 : vector<2x8x128xf32>
      %cst_13 = arith.constant 1.000000e+00 : f32
      %29 = vector.broadcast %cst_13 : f32 to vector<2x8x128xf32>
      %30 = arith.divf %29, %28 : vector<2x8x128xf32>
      %cst_14 = arith.constant 0.000000e+00 : f32
      %31 = vector.broadcast %cst_14 : f32 to vector<2x8x128xf32>
      %32 = arith.cmpf oge, %17, %31 : vector<2x8x128xf32>
      %33 = arith.mulf %26, %30 : vector<2x8x128xf32>
      %34 = arith.select %32, %30, %33 : vector<2x8x128xi1>, vector<2x8x128xf32>
      %cst_15 = arith.constant 0.000000e+00 : f32
      %35 = vector.broadcast %cst_15 : f32 to vector<2x8x128xf32>
      %36 = arith.maximumf %17, %35 : vector<2x8x128xf32>
      %cst_16 = arith.constant 0.000000e+00 : f32
      %37 = vector.broadcast %cst_16 : f32 to vector<2x8x128xf32>
      %38 = arith.select %18, %17, %37 : vector<2x8x128xi1>, vector<2x8x128xf32>
      %39 = arith.subf %36, %38 : vector<2x8x128xf32>
      %40 = math.log1p %26 : vector<2x8x128xf32>
      %41 = arith.addf %39, %40 : vector<2x8x128xf32>
      %cst_17 = arith.constant 1.000000e+00 : f32
      %42 = vector.broadcast %cst_17 : f32 to vector<2x8x128xf32>
      %43 = arith.subf %42, %34 : vector<2x8x128xf32>
      %44 = arith.select %18, %43, %34 : vector<2x8x128xi1>, vector<2x8x128xf32>
      %cst_18 = arith.constant 2.500000e-01 : f32
      %cst_19 = arith.constant 7.500000e-01 : f32
      %45 = vector.broadcast %cst_18 : f32 to vector<2x8x128xf32>
      %46 = vector.broadcast %cst_19 : f32 to vector<2x8x128xf32>
      %47 = arith.select %18, %45, %46 : vector<2x8x128xi1>, vector<2x8x128xf32>
      %48 = arith.mulf %44, %44 : vector<2x8x128xf32>
      %49 = arith.mulf %47, %48 : vector<2x8x128xf32>
      %50 = arith.mulf %49, %41 : vector<2x8x128xf32>
      %51 = arith.mulf %50, %20 : vector<2x8x128xf32>
      %52 = arith.mulf %34, %20 : vector<2x8x128xf32>
      %c0_20 = arith.constant 0 : index
      %c0_21 = arith.constant 0 : index
      %c0_22 = arith.constant 0 : index
      %53 = vector.load %arg4[%c0_20, %c0_21, %c0_22] : memref<2x4x128xf32, #tpu.memory_space<vmem>>, vector<2x4x128xf32>
      %cst_23 = arith.constant dense<0.000000e+00> : vector<2x128xf32>
      %54 = vector.multi_reduction <add>, %51, %cst_23 [1] : vector<2x8x128xf32> to vector<2x128xf32>
      %55 = vector.shape_cast %54 : vector<2x128xf32> to vector<2x1x128xf32>
      %56 = arith.mulf %34, %22 : vector<2x8x128xf32>
      %cst_24 = arith.constant dense<0.000000e+00> : vector<2x128xf32>
      %57 = vector.multi_reduction <add>, %56, %cst_24 [1] : vector<2x8x128xf32> to vector<2x128xf32>
      %58 = vector.shape_cast %57 : vector<2x128xf32> to vector<2x1x128xf32>
      %cst_25 = arith.constant dense<0.000000e+00> : vector<2x128xf32>
      %59 = vector.multi_reduction <add>, %52, %cst_25 [1] : vector<2x8x128xf32> to vector<2x128xf32>
      %60 = vector.shape_cast %59 : vector<2x128xf32> to vector<2x1x128xf32>
      %cst_26 = arith.constant dense<0.000000e+00> : vector<2x128xf32>
      %61 = vector.multi_reduction <add>, %22, %cst_26 [1] : vector<2x8x128xf32> to vector<2x128xf32>
      %62 = vector.shape_cast %61 : vector<2x128xf32> to vector<2x1x128xf32>
      %63 = tpu.concatenate %55, %58, %60, %62 in 1 : vector<2x1x128xf32>, vector<2x1x128xf32>, vector<2x1x128xf32>, vector<2x1x128xf32> -> vector<2x4x128xf32>
      %64 = arith.addf %53, %63 : vector<2x4x128xf32>
      %c0_27 = arith.constant 0 : index
      %c0_28 = arith.constant 0 : index
      %c0_29 = arith.constant 0 : index
      %65 = vector.load %arg4[%c0_27, %c0_28, %c0_29] : memref<2x4x128xf32, #tpu.memory_space<vmem>>, vector<2x4x128xf32>
      tpu.vector_store %arg4[%c0_27, %c0_28, %c0_29], %64 {strides = array<i32>} : memref<2x4x128xf32, #tpu.memory_space<vmem>>, vector<2x4x128xf32>,
    } else {
    }
    return
  }
  func.func @transform_0(%arg0: i32, %arg1: i32) -> (i32, i32, i32) {
    %c0_i32 = arith.constant 0 : i32
    %c0_i32_0 = arith.constant 0 : i32
    return %arg0, %arg1, %c0_i32 : i32, i32, i32
  }
  func.func @transform_1(%arg0: i32, %arg1: i32) -> (i32, i32, i32) {
    %c0_i32 = arith.constant 0 : i32
    %c0_i32_0 = arith.constant 0 : i32
    return %arg0, %arg1, %c0_i32 : i32, i32, i32
  }
  func.func @transform_2(%arg0: i32, %arg1: i32) -> (i32, i32, i32) {
    %c0_i32 = arith.constant 0 : i32
    %c0_i32_0 = arith.constant 0 : i32
    %c0_i32_1 = arith.constant 0 : i32
    return %arg0, %c0_i32, %c0_i32_0 : i32, i32, i32
  }
}

</mosaic_0001>

<llo_original>
// kernel: tpu_custom_call.1
$region0: #{tpu_custom_call.1}
  #allocation0 [shape = 'u32[]', space=smem, size = 0x4, offset = 0x4, fixed_abs, tag = 'smem constant byte address 0x4 - core index']
  #allocation1 [shape = 'u32[72,128]{1,0:T(1,128)}', space=vmem, size = 0x9000, scoped, tag = 'internal scratch']
  #allocation8 [shape = 's32[]', space=sflag, size = 0x4, offset = 0, fixed_abs, tag = 'sflag constant byte address 0x0 - dummy sync flag']
  #allocation10 [shape = 's32[]', space=sflag, size = 0x4, offset = 0, fixed_abs, tag = 'sflag constant byte address 0x0 - dummy sync flag']
  %s0 = inlined_call_operand.hbm [shape: f32[2,2,128], index: 0, kind: input, shape index: {}]
  %s1 = inlined_call_operand.hbm [shape: f32[2,2,128], index: 1, kind: input, shape index: {}]
  %s2 = inlined_call_operand.hbm [shape: f32[2,4,128], index: 2, kind: output, shape index: {}]
  %s3 = sld [smem:[#allocation0]]
  $region38: #{tpu_custom_call.1} parent=0
    _
  %s5 = ssub.s32 1, %s3
  %s6 = scalar_select 0, %s5, %s3
  $region1: #{tpu_custom_call.1} parent=0
    #allocation2 [shape = 'u8[8192]{0}', space=vmem, size = 0x2000, scoped, tag = 'input window, operand 0, single buffered']
    #allocation3 [shape = 's32[1]{0}', space=sflag, size = 0x4, scoped, tag = 'scoped memory for tpu_custom_call.1']
    #allocation4 [shape = 's32[1]{0}', space=sflag, size = 0x4, scoped, tag = 'scoped memory for tpu_custom_call.1']
    #allocation5 [shape = 'u8[8192]{0}', space=vmem, size = 0x2000, scoped, tag = 'input window, operand 1, single buffered']
    #allocation6 [shape = 's32[1]{0}', space=sflag, size = 0x4, scoped, tag = 'scoped memory for tpu_custom_call.1']
    #allocation7 [shape = 'u8[4096]{0}', space=vmem, size = 0x1000, scoped, tag = 'output window, operand 0, single buffered']
    %7 = vsyncpa [#allocation3], 0
    %8 = vsyncpa [#allocation6], 0
    %9 = vsyncpa [#allocation4], 0
    // Predicated region
    $region2: #{tpu_custom_call.1} parent=1 // pred_check
      _
    $region3: #{tpu_custom_call.1} parent=1 // pred_check_branch
      %11 = sbr.rel (0) target = $region5
    $region4: #{tpu_custom_call.1} parent=1 // pred_region
      #allocation9 [shape = 'u32[6]{0}', space=smem, size = 0x18, scoped, tag = 'DMA stride descriptor']
      %13 = vsyncadd [#allocation3], 192
      %s15 = sshll.u32 1, 14
      %s16 = sxor.u32 4294967295, %s15
      %s18 = sld [smem:[#allocation0]]
      %s19 = sadd.s32 2, %s18
      %s21 = sshll.u32 7, 26
      %s22 = sxor.u32 4294967295, %s21
      %s23 = sand.u32 0, %s22
      %s24 = sshll.u32 %s19, 26
      %s25 = sor.u32 %s23, %s24
      %s26 = sshll.u32 %s0, 4
      %s27 = int_to_ptr.hbm [resolvable:$true] %s26
      %s28 = sshll.u32 [#allocation2], 4
      %s29 = int_to_ptr.vmem [resolvable:$true] %s28
      %35 = sst [smem:[#allocation9]] 32
      %s36 = scalar_lea.smem [#allocation9], 1
      %37 = sst [smem:[%s36]] 128
      %s38 = scalar_lea.smem [#allocation9], 2
      %39 = sst [smem:[%s38]] 1
      %s40 = scalar_lea.smem [#allocation9], 3
      %41 = sst [smem:[%s40]] 32
      %s42 = scalar_lea.smem [#allocation9], 4
      %43 = sst [smem:[%s42]] 32
      %s44 = scalar_lea.smem [#allocation9], 5
      %45 = sst [smem:[%s44]] 2
      %47 = dma.general %s27, 64, %s29, [#allocation3], [#allocation8], [#allocation9], %s25, 0
    $region5: #{tpu_custom_call.1} parent=1 // pred_fallthru
      _
    // Predicated region
    $region6: #{tpu_custom_call.1} parent=1 // pred_check
      _
    $region7: #{tpu_custom_call.1} parent=1 // pred_check_branch
      %49 = sbr.rel (0) target = $region9
    $region8: #{tpu_custom_call.1} parent=1 // pred_region
      #allocation11 [shape = 'u32[6]{0}', space=smem, size = 0x18, scoped, tag = 'DMA stride descriptor']
      %51 = vsyncadd [#allocation6], 192
      %s53 = sshll.u32 1, 14
      %s54 = sxor.u32 4294967295, %s53
      %s56 = sld [smem:[#allocation0]]
      %s57 = sadd.s32 2, %s56
      %s59 = sshll.u32 7, 26
      %s60 = sxor.u32 4294967295, %s59
      %s61 = sand.u32 0, %s60
      %s62 = sshll.u32 %s57, 26
      %s63 = sor.u32 %s61, %s62
      %s64 = sshll.u32 %s1, 4
      %s65 = int_to_ptr.hbm [resolvable:$true] %s64
      %s66 = sshll.u32 [#allocation5], 4
      %s67 = int_to_ptr.vmem [resolvable:$true] %s66
      %73 = sst [smem:[#allocation11]] 32
      %s74 = scalar_lea.smem [#allocation11], 1
      %75 = sst [smem:[%s74]] 128
      %s76 = scalar_lea.smem [#allocation11], 2
      %77 = sst [smem:[%s76]] 1
      %s78 = scalar_lea.smem [#allocation11], 3
      %79 = sst [smem:[%s78]] 32
      %s80 = scalar_lea.smem [#allocation11], 4
      %81 = sst [smem:[%s80]] 32
      %s82 = scalar_lea.smem [#allocation11], 5
      %83 = sst [smem:[%s82]] 2
      %85 = dma.general %s65, 64, %s67, [#allocation6], [#allocation10], [#allocation11], %s63, 0
    $region9: #{tpu_custom_call.1} parent=1 // pred_fallthru
      _
    // Predicated region
    $region10: #{tpu_custom_call.1} parent=1 // pred_check
      _
    $region11: #{tpu_custom_call.1} parent=1 // pred_check_branch
      %87 = sbr.rel (0) target = $region13
    $region12: #{tpu_custom_call.1} parent=1 // pred_region
      %89 = dma.done [#allocation3], 256
    $region13: #{tpu_custom_call.1} parent=1 // pred_fallthru
      _
    // Predicated region
    $region14: #{tpu_custom_call.1} parent=1 // pred_check
      _
    $region15: #{tpu_custom_call.1} parent=1 // pred_check_branch
      %91 = sbr.rel (0) target = $region17
    $region16: #{tpu_custom_call.1} parent=1 // pred_region
      %93 = dma.done [#allocation6], 256
    $region17: #{tpu_custom_call.1} parent=1 // pred_fallthru
      _
    %p94 = scmp.eq.s32.totalorder 0, 0
    // Predicated region
    $region18: #{tpu_custom_call.1} parent=1 // pred_check
      %p95 = pneg %p94
    $region19: #{tpu_custom_call.1} parent=1 // pred_check_branch
      %97 = sbr.rel (%p95) target = $region21
    $region20: #{tpu_custom_call.1} parent=1 // pred_region
      %98 = vst [vmem:[#allocation7] sm:$0xf] 0.0
      %99 = vst [vmem:[#allocation7 + $0x4] sm:$0xf] 0.0
    $region21: #{tpu_custom_call.1} parent=1 // pred_fallthru
      _
    %p100 = scmp.ne.s32.totalorder 0, 0
    // Predicated region
    $region22: #{tpu_custom_call.1} parent=1 // pred_check
      %p101 = pneg %p100
    $region23: #{tpu_custom_call.1} parent=1 // pred_check_branch
      %103 = sbr.rel (%p101) target = $region25
    $region24: #{tpu_custom_call.1} parent=1 // pred_region
      %v104 = vld [vmem:[#allocation2] sm:$0xff]
      %v105 = vld [vmem:[#allocation2 + $0x8] sm:$0xff]
      %v106 = vld [vmem:[#allocation5] sm:$0xff]
      %v107 = vld [vmem:[#allocation5 + $0x8] sm:$0xff]
      %vm108 = vcmp.ne.f32.partialorder %v106, 0.0
      %vm109 = vcmp.ne.f32.partialorder %v107, 0.0
      %v110 = vsel %vm108, 1, 0
      %v111 = vsel %vm109, 1, 0
      %v112 = vcvt.s32.f32 %v110
      %v113 = vcvt.s32.f32 %v111
      %v114 = vand.u32 2147483647, %v104
      %v115 = vand.u32 2147483647, %v105
      %v116 = vsub.f32 0.0, %v114
      %v117 = vsub.f32 0.0, %v115
      %v118 = vmul.f32 %v116, 1.442695
      %v119 = vpow.pop %v118
      %v120 = vmul.f32 %v117, 1.442695
      %v121 = vpow.pop %v120
      %v122 = vadd.f32 %v119, 1.0
      %v123 = vadd.f32 %v121, 1.0
      %v124 = vrcp.pop %v122
      %v125 = vmul.f32 %v122, %v124
      %v126 = vsub.f32 1.0, %v125
      %v127 = vmul.f32 %v124, %v126
      %v128 = vadd.f32 %v124, %v127
      %vm129 = vweird.f32 %v122
      %vm130 = vweird.f32 %v124
      %vm131 = vmor %vm129, %vm130
      %v132 = vsel %vm131, %v124, %v128
      %v133 = vand.u32 2147483647, %v122
      %vm134 = vcmp.eq.f32.partialorder %v133, 8.507059e+37
      %v135 = vand.u32 %v122, 2147483648
      %v136 = vor.u32 1.1754944e-38, %v135
      %v137 = vsel %vm134, %v136, %v132
      %v138 = vmul.f32 1.0, %v137
      %v139 = vrcp.pop %v123
      %v140 = vmul.f32 %v123, %v139
      %v141 = vsub.f32 1.0, %v140
      %v142 = vmul.f32 %v139, %v141
      %v143 = vadd.f32 %v139, %v142
      %vm144 = vweird.f32 %v123
      %vm145 = vweird.f32 %v139
      %vm146 = vmor %vm144, %vm145
      %v147 = vsel %vm146, %v139, %v143
      %v148 = vand.u32 2147483647, %v123
      %vm149 = vcmp.eq.f32.partialorder %v148, 8.507059e+37
      %v150 = vand.u32 %v123, 2147483648
      %v151 = vor.u32 1.1754944e-38, %v150
      %v152 = vsel %vm149, %v151, %v147
      %v153 = vmul.f32 1.0, %v152
      %vm154 = vcmp.ge.f32.partialorder %v104, 0.0
      %vm155 = vcmp.ge.f32.partialorder %v105, 0.0
      %v156 = vmul.f32 %v119, %v138
      %v157 = vmul.f32 %v121, %v153
      %v158 = vsel %vm154, %v138, %v156
      %v159 = vsel %vm155, %v153, %v157
      %v160 = vmax.f32 %v104, 0.0
      %v161 = vmax.f32 %v105, 0.0
      %v162 = vsel %vm108, %v104, 0.0
      %v163 = vsel %vm109, %v105, 0.0
      %v164 = vsub.f32 %v160, %v162
      %v165 = vsub.f32 %v161, %v163
      %v166 = vadd.f32 %v119, 1.0
      %v167 = vlog2.pop %v166
      %v168 = vmul.f32 %v167, 0.6931472
      %v169 = vmul.f32 -0.5, %v119
      %v170 = vadd.f32 %v169, 1.0
      %v171 = vmul.f32 %v170, %v119
      %v172 = vand.u32 2147483647, %v119
      %vm173 = vcmp.lt.f32.partialorder %v172, 0.0004427343
      %v174 = vsel %vm173, %v171, %v168
      %v175 = vadd.f32 %v121, 1.0
      %v176 = vlog2.pop %v175
      %v177 = vmul.f32 %v176, 0.6931472
      %v178 = vmul.f32 -0.5, %v121
      %v179 = vadd.f32 %v178, 1.0
      %v180 = vmul.f32 %v179, %v121
      %v181 = vand.u32 2147483647, %v121
      %vm182 = vcmp.lt.f32.partialorder %v181, 0.0004427343
      %v183 = vsel %vm182, %v180, %v177
      %v184 = vadd.f32 %v164, %v174
      %v185 = vadd.f32 %v165, %v183
      %v186 = vsub.f32 1.0, %v158
      %v187 = vsub.f32 1.0, %v159
      %v188 = vsel %vm108, %v186, %v158
      %v189 = vsel %vm109, %v187, %v159
      %v190 = vsel %vm108, 0.25, 0.75
      %v191 = vsel %vm109, 0.25, 0.75
      %v192 = vmul.f32 %v188, %v188
      %v193 = vmul.f32 %v189, %v189
      %v194 = vmul.f32 %v190, %v192
      %v195 = vmul.f32 %v191, %v193
      %v196 = vmul.f32 %v194, %v184
      %v197 = vmul.f32 %v195, %v185
      %v198 = vld [vmem:[#allocation7] sm:$0xf]
      %v199 = vld [vmem:[#allocation7 + $0x4] sm:$0xf]
      %v200 = vrot.slane %v196, 4
      %v201 = vadd.f32 %v196, %v200
      %v202 = vrot.slane %v201, 2
      %v203 = vadd.f32 %v201, %v202
      %v204 = vrot.slane %v203, 1
      %v205 = vadd.f32 %v203, %v204
      %v206 = vrot.slane %v197, 4
      %v207 = vadd.f32 %v197, %v206
      %v208 = vrot.slane %v207, 2
      %v209 = vadd.f32 %v207, %v208
      %v210 = vrot.slane %v209, 1
      %v211 = vadd.f32 %v209, %v210
      %v212 = vmul.f32 %v158, %v112
      %v213 = vmul.f32 %v159, %v113
      %v214 = vrot.slane %v212, 4
      %v215 = vadd.f32 %v212, %v214
      %v216 = vrot.slane %v215, 2
      %v217 = vadd.f32 %v215, %v216
      %v218 = vrot.slane %v217, 1
      %v219 = vadd.f32 %v217, %v218
      %v220 = vrot.slane %v213, 4
      %v221 = vadd.f32 %v213, %v220
      %v222 = vrot.slane %v221, 2
      %v223 = vadd.f32 %v221, %v222
      %v224 = vrot.slane %v223, 1
      %v225 = vadd.f32 %v223, %v224
      %v226 = vrot.slane %v158, 4
      %v227 = vadd.f32 %v158, %v226
      %v228 = vrot.slane %v227, 2
      %v229 = vadd.f32 %v227, %v228
      %v230 = vrot.slane %v229, 1
      %v231 = vadd.f32 %v229, %v230
      %v232 = vrot.slane %v159, 4
      %v233 = vadd.f32 %v159, %v232
      %v234 = vrot.slane %v233, 2
      %v235 = vadd.f32 %v233, %v234
      %v236 = vrot.slane %v235, 1
      %v237 = vadd.f32 %v235, %v236
      %v238 = vrot.slane %v112, 4
      %v239 = vadd.f32 %v112, %v238
      %v240 = vrot.slane %v239, 2
      %v241 = vadd.f32 %v239, %v240
      %v242 = vrot.slane %v241, 1
      %v243 = vadd.f32 %v241, %v242
      %v244 = vrot.slane %v113, 4
      %v245 = vadd.f32 %v113, %v244
      %v246 = vrot.slane %v245, 2
      %v247 = vadd.f32 %v245, %v246
      %v248 = vrot.slane %v247, 1
      %v249 = vadd.f32 %v247, %v248
      %vm250 = vcmask 1040384
      %v251 = vsel %vm250, %v205, %v219
      %v252 = vsel %vm250, %v211, %v225
      %vm253 = vcmask 1041408
      %v254 = vsel %vm253, %v251, %v231
      %v255 = vsel %vm253, %v252, %v237
      %vm256 = vcmask 1042432
      %v257 = vsel %vm256, %v254, %v243
      %v258 = vsel %vm256, %v255, %v249
      %v259 = vadd.f32 %v198, %v257
      %v260 = vadd.f32 %v199, %v258
      %261 = vst [vmem:[#allocation7] sm:$0xf] %v259
      %262 = vst [vmem:[#allocation7 + $0x4] sm:$0xf] %v260
    $region25: #{tpu_custom_call.1} parent=1 // pred_fallthru
      _
    // Predicated region
    $region26: #{tpu_custom_call.1} parent=1 // pred_check
      %p263 = pneg %p94
    $region27: #{tpu_custom_call.1} parent=1 // pred_check_branch
      %265 = sbr.rel (%p263) target = $region29
    $region28: #{tpu_custom_call.1} parent=1 // pred_region
      %v266 = vld [vmem:[#allocation2] sm:$0xff]
      %v267 = vld [vmem:[#allocation2 + $0x8] sm:$0xff]
      %v268 = vld [vmem:[#allocation5] sm:$0xff]
      %v269 = vld [vmem:[#allocation5 + $0x8] sm:$0xff]
      %vm270 = vcmp.ne.f32.partialorder %v268, 0.0
      %vm271 = vcmp.ne.f32.partialorder %v269, 0.0
      %v272 = vlaneseq
      %v273 = vshrl.u32 %v272, 7
      %vm274 = vcmp.lt.s32.totalorder %v273, 2
      %v275 = vsel %vm274, %v266, 0.0
      %v276 = vsel %vm274, %v267, 0.0
      %vm277 = vmand %vm270, %vm274
      %vm278 = vmand %vm271, %vm274
      %v279 = vsel %vm274, 1, 0
      %v280 = vcvt.s32.f32 %v279
      %v281 = vsel %vm277, 1, 0
      %v282 = vsel %vm278, 1, 0
      %v283 = vcvt.s32.f32 %v281
      %v284 = vcvt.s32.f32 %v282
      %v285 = vand.u32 2147483647, %v275
      %v286 = vand.u32 2147483647, %v276
      %v287 = vsub.f32 0.0, %v285
      %v288 = vsub.f32 0.0, %v286
      %v289 = vmul.f32 %v287, 1.442695
      %v290 = vpow.pop %v289
      %v291 = vmul.f32 %v288, 1.442695
      %v292 = vpow.pop %v291
      %v293 = vadd.f32 %v290, 1.0
      %v294 = vadd.f32 %v292, 1.0
      %v295 = vrcp.pop %v293
      %v296 = vmul.f32 %v293, %v295
      %v297 = vsub.f32 1.0, %v296
      %v298 = vmul.f32 %v295, %v297
      %v299 = vadd.f32 %v295, %v298
      %vm300 = vweird.f32 %v293
      %vm301 = vweird.f32 %v295
      %vm302 = vmor %vm300, %vm301
      %v303 = vsel %vm302, %v295, %v299
      %v304 = vand.u32 2147483647, %v293
      %vm305 = vcmp.eq.f32.partialorder %v304, 8.507059e+37
      %v306 = vand.u32 %v293, 2147483648
      %v307 = vor.u32 1.1754944e-38, %v306
      %v308 = vsel %vm305, %v307, %v303
      %v309 = vmul.f32 1.0, %v308
      %v310 = vrcp.pop %v294
      %v311 = vmul.f32 %v294, %v310
      %v312 = vsub.f32 1.0, %v311
      %v313 = vmul.f32 %v310, %v312
      %v314 = vadd.f32 %v310, %v313
      %vm315 = vweird.f32 %v294
      %vm316 = vweird.f32 %v310
      %vm317 = vmor %vm315, %vm316
      %v318 = vsel %vm317, %v310, %v314
      %v319 = vand.u32 2147483647, %v294
      %vm320 = vcmp.eq.f32.partialorder %v319, 8.507059e+37
      %v321 = vand.u32 %v294, 2147483648
      %v322 = vor.u32 1.1754944e-38, %v321
      %v323 = vsel %vm320, %v322, %v318
      %v324 = vmul.f32 1.0, %v323
      %vm325 = vcmp.ge.f32.partialorder %v275, 0.0
      %vm326 = vcmp.ge.f32.partialorder %v276, 0.0
      %v327 = vmul.f32 %v290, %v309
      %v328 = vmul.f32 %v292, %v324
      %v329 = vsel %vm325, %v309, %v327
      %v330 = vsel %vm326, %v324, %v328
      %v331 = vmax.f32 %v275, 0.0
      %v332 = vmax.f32 %v276, 0.0
      %v333 = vsel %vm277, %v275, 0.0
      %v334 = vsel %vm278, %v276, 0.0
      %v335 = vsub.f32 %v331, %v333
      %v336 = vsub.f32 %v332, %v334
      %v337 = vadd.f32 %v290, 1.0
      %v338 = vlog2.pop %v337
      %v339 = vmul.f32 %v338, 0.6931472
      %v340 = vmul.f32 -0.5, %v290
      %v341 = vadd.f32 %v340, 1.0
      %v342 = vmul.f32 %v341, %v290
      %v343 = vand.u32 2147483647, %v290
      %vm344 = vcmp.lt.f32.partialorder %v343, 0.0004427343
      %v345 = vsel %vm344, %v342, %v339
      %v346 = vadd.f32 %v292, 1.0
      %v347 = vlog2.pop %v346
      %v348 = vmul.f32 %v347, 0.6931472
      %v349 = vmul.f32 -0.5, %v292
      %v350 = vadd.f32 %v349, 1.0
      %v351 = vmul.f32 %v350, %v292
      %v352 = vand.u32 2147483647, %v292
      %vm353 = vcmp.lt.f32.partialorder %v352, 0.0004427343
      %v354 = vsel %vm353, %v351, %v348
      %v355 = vadd.f32 %v335, %v345
      %v356 = vadd.f32 %v336, %v354
      %v357 = vsub.f32 1.0, %v329
      %v358 = vsub.f32 1.0, %v330
      %v359 = vsel %vm277, %v357, %v329
      %v360 = vsel %vm278, %v358, %v330
      %v361 = vsel %vm277, 0.25, 0.75
      %v362 = vsel %vm278, 0.25, 0.75
      %v363 = vmul.f32 %v359, %v359
      %v364 = vmul.f32 %v360, %v360
      %v365 = vmul.f32 %v361, %v363
      %v366 = vmul.f32 %v362, %v364
      %v367 = vmul.f32 %v365, %v355
      %v368 = vmul.f32 %v366, %v356
      %v369 = vmul.f32 %v367, %v280
      %v370 = vmul.f32 %v368, %v280
      %v371 = vmul.f32 %v329, %v280
      %v372 = vmul.f32 %v330, %v280
      %v373 = vld [vmem:[#allocation7] sm:$0xf]
      %v374 = vld [vmem:[#allocation7 + $0x4] sm:$0xf]
      %v375 = vrot.slane %v369, 4
      %v376 = vadd.f32 %v369, %v375
      %v377 = vrot.slane %v376, 2
      %v378 = vadd.f32 %v376, %v377
      %v379 = vrot.slane %v378, 1
      %v380 = vadd.f32 %v378, %v379
      %v381 = vrot.slane %v370, 4
      %v382 = vadd.f32 %v370, %v381
      %v383 = vrot.slane %v382, 2
      %v384 = vadd.f32 %v382, %v383
      %v385 = vrot.slane %v384, 1
      %v386 = vadd.f32 %v384, %v385
      %v387 = vmul.f32 %v329, %v283
      %v388 = vmul.f32 %v330, %v284
      %v389 = vrot.slane %v387, 4
      %v390 = vadd.f32 %v387, %v389
      %v391 = vrot.slane %v390, 2
      %v392 = vadd.f32 %v390, %v391
      %v393 = vrot.slane %v392, 1
      %v394 = vadd.f32 %v392, %v393
      %v395 = vrot.slane %v388, 4
      %v396 = vadd.f32 %v388, %v395
      %v397 = vrot.slane %v396, 2
      %v398 = vadd.f32 %v396, %v397
      %v399 = vrot.slane %v398, 1
      %v400 = vadd.f32 %v398, %v399
      %v401 = vrot.slane %v371, 4
      %v402 = vadd.f32 %v371, %v401
      %v403 = vrot.slane %v402, 2
      %v404 = vadd.f32 %v402, %v403
      %v405 = vrot.slane %v404, 1
      %v406 = vadd.f32 %v404, %v405
      %v407 = vrot.slane %v372, 4
      %v408 = vadd.f32 %v372, %v407
      %v409 = vrot.slane %v408, 2
      %v410 = vadd.f32 %v408, %v409
      %v411 = vrot.slane %v410, 1
      %v412 = vadd.f32 %v410, %v411
      %v413 = vrot.slane %v283, 4
      %v414 = vadd.f32 %v283, %v413
      %v415 = vrot.slane %v414, 2
      %v416 = vadd.f32 %v414, %v415
      %v417 = vrot.slane %v416, 1
      %v418 = vadd.f32 %v416, %v417
      %v419 = vrot.slane %v284, 4
      %v420 = vadd.f32 %v284, %v419
      %v421 = vrot.slane %v420, 2
      %v422 = vadd.f32 %v420, %v421
      %v423 = vrot.slane %v422, 1
      %v424 = vadd.f32 %v422, %v423
      %vm425 = vcmask 1040384
      %v426 = vsel %vm425, %v380, %v394
      %v427 = vsel %vm425, %v386, %v400
      %vm428 = vcmask 1041408
      %v429 = vsel %vm428, %v426, %v406
      %v430 = vsel %vm428, %v427, %v412
      %vm431 = vcmask 1042432
      %v432 = vsel %vm431, %v429, %v418
      %v433 = vsel %vm431, %v430, %v424
      %v434 = vadd.f32 %v373, %v432
      %v435 = vadd.f32 %v374, %v433
      %436 = vst [vmem:[#allocation7] sm:$0xf] %v434
      %437 = vst [vmem:[#allocation7 + $0x4] sm:$0xf] %v435
    $region29: #{tpu_custom_call.1} parent=1 // pred_fallthru
      _
    // Predicated region
    $region30: #{tpu_custom_call.1} parent=1 // pred_check
      _
    $region31: #{tpu_custom_call.1} parent=1 // pred_check_branch
      %439 = sbr.rel (0) target = $region33
    $region32: #{tpu_custom_call.1} parent=1 // pred_region
      %441 = vsyncadd [#allocation4], 0
      %s442 = sshll.u32 [#allocation7], 4
      %s443 = int_to_ptr.vmem [resolvable:$true] %s442
      %s444 = sshll.u32 %s2, 4
      %s445 = int_to_ptr.hbm [resolvable:$true] %s444
      %450 = dma.vmem_to_hbm [thread:$0]  %s443, 128, %s445, [#allocation4], 64, 64, 4
    $region33: #{tpu_custom_call.1} parent=1 // pred_fallthru
      _
    // Predicated region
    $region34: #{tpu_custom_call.1} parent=1 // pred_check
      _
    $region35: #{tpu_custom_call.1} parent=1 // pred_check_branch
      %452 = sbr.rel (0) target = $region37
    $region36: #{tpu_custom_call.1} parent=1 // pred_region
      %454 = dma.done [#allocation4], 128
    $region37: #{tpu_custom_call.1} parent=1 // pred_fallthru
      _
    %455 = vsyncpa [#allocation3], 1
    %456 = vsyncpa [#allocation6], 1
    %457 = vsyncpa [#allocation4], 1

</llo_original>
